<compile_context>
chip_gen: v6e
topology: v6e:2x2x1
jax: 0.10.0
libtpu: 0.0.40
codegen_flags: <defaults>
</compile_context>

<pallas_src>
import functools

import jax
import jax.numpy as jnp
from jax.experimental import pallas as pl
from jax.experimental.pallas import tpu as pltpu


def decoder_kernel(num_layers, hidden_size, *refs):
    # in : tok (B,1) i32, emb (V,H) f32 (cols >= E zero),
    #      state_in (B, 2*L*H) f32 packed [h_0|c_0|h_1|c_1|...],
    #      w_ih_all (L,H,4H) bf16, w_hh_all (L,H,4H) bf16, b_all (L,1,4H) f32,
    #      fc_w (H,V_pad) bf16, fc_b (1,V_pad) f32
    # out: logits (B,V_pad) f32, state_out (B, 2*L*H) f32 (same HBM buffer as state_in)
    (tok_ref, emb_ref, state_in_ref, w_ih_ref, w_hh_ref, b_ref,
     fc_w_ref, fc_b_ref, logits_ref, state_out_ref) = refs

    L, H = num_layers, hidden_size
    B = tok_ref.shape[0]
    V = emb_ref.shape[0]

    # In-kernel embedding lookup as a one-hot MXU matmul (fine at toy V; default MXU
    # f32 precision truncates toward bf16, which is within tolerance since the layer
    # matmuls are bf16 anyway).
    tok = tok_ref[...]                                              # (B, 1) i32
    vocab_iota = jax.lax.broadcasted_iota(jnp.int32, (B, V), 1)
    onehot = (vocab_iota == tok).astype(jnp.float32)                # (B, V)
    x = jnp.dot(onehot, emb_ref[...],
                preferred_element_type=jnp.float32)                 # (B, H) f32
    # TODO(synk): nn.Dropout is stochastic in train mode; implemented as identity (eval).

    # Loop-invariant gate mask (hoisted): packed gate order (i, f, o, g) ->
    # sigmoid on lanes [0, 3H), tanh on [3H, 4H).
    lane = jax.lax.broadcasted_iota(jnp.int32, (B, 4 * H), 1)
    is_sig = lane < 3 * H

    for l in range(L):                                              # static unroll over layers
        h_prev = state_in_ref[:, l * 2 * H:l * 2 * H + H]           # (B, H) f32
        c_prev = state_in_ref[:, l * 2 * H + H:(l + 1) * 2 * H]     # (B, H) f32

        # Two bf16 MXU matmuls with f32 accumulation; no lane-dim concat on the chain.
        z = (jnp.dot(x.astype(jnp.bfloat16), w_ih_ref[l],
                     preferred_element_type=jnp.float32)
             + jnp.dot(h_prev.astype(jnp.bfloat16), w_hh_ref[l],
                       preferred_element_type=jnp.float32)
             + b_ref[l])                                            # (B, 4H) f32

        # sigmoid(z) = 0.5*(1 + tanh(0.5*z)): one EUP tanh pass over the whole slab.
        t = jnp.tanh(jnp.where(is_sig, 0.5 * z, z))
        acts = jnp.where(is_sig, 0.5 * (t + 1.0), t)
        i_g = acts[:, 0 * H:1 * H]
        f_g = acts[:, 1 * H:2 * H]
        o_g = acts[:, 2 * H:3 * H]
        g_g = acts[:, 3 * H:4 * H]

        c_new = f_g * c_prev + i_g * g_g                            # f32 elementwise (v5e-safe)
        h_new = o_g * jnp.tanh(c_new)
        state_out_ref[:, l * 2 * H:l * 2 * H + H] = h_new
        state_out_ref[:, l * 2 * H + H:(l + 1) * 2 * H] = c_new
        x = h_new                                                   # input to next layer

    # Final FC: lane-padded to a multiple of 128 so the logits store/writeback is dense.
    logits_ref[...] = (jnp.dot(x.astype(jnp.bfloat16), fc_w_ref[...],
                               preferred_element_type=jnp.float32) + fc_b_ref[...])


def pack_params(params):
    """One-time host-side packing: fuse gates, reorder (i,f,g,o)->(i,f,o,g), stack layers,
    zero-pad layer-0's K (and embedding table) to H, lane-pad the FC to a multiple of 128."""
    emb = params["embedding"]
    V, E = emb.shape
    H = params["w_hh"][0].shape[2]
    L = len(params["w_ih"])
    assert E <= H, "packing assumes embedding_dim <= hidden_size"
    perm = (0, 1, 3, 2)                      # PyTorch gate order (i, f, g, o) -> (i, f, o, g)
    V_pad = ((V + 127) // 128) * 128

    emb_pad = jnp.zeros((V, H), jnp.float32).at[:, :E].set(emb)

    w_ih_all, w_hh_all, b_all = [], [], []
    for l in range(L):
        w_ih = params["w_ih"][l]                                    # (4, in_dim, H)
        in_dim = w_ih.shape[1]
        w_ih_cat = jnp.concatenate([w_ih[g] for g in perm], axis=1)         # (in_dim, 4H)
        w_ih_all.append(jnp.zeros((H, 4 * H), jnp.float32).at[:in_dim].set(w_ih_cat))
        w_hh_all.append(jnp.concatenate([params["w_hh"][l][g] for g in perm], axis=1))
        b_all.append(jnp.concatenate([params["b"][l][g] for g in perm], axis=1))

    fc_w_pad = jnp.zeros((H, V_pad), jnp.float32).at[:, :V].set(params["fc_w"])
    fc_b_pad = jnp.zeros((1, V_pad), jnp.float32).at[:, :V].set(params["fc_b"])
    return {
        "embedding": emb_pad,                                       # (V, H)    f32
        "w_ih_all": jnp.stack(w_ih_all).astype(jnp.bfloat16),       # (L, H, 4H) bf16
        "w_hh_all": jnp.stack(w_hh_all).astype(jnp.bfloat16),       # (L, H, 4H) bf16
        "b_all": jnp.stack(b_all),                                  # (L, 1, 4H) f32
        "fc_w": fc_w_pad.astype(jnp.bfloat16),                      # (H, V_pad) bf16
        "fc_b": fc_b_pad,                                           # (1, V_pad) f32
    }


@jax.jit
def decoder_forward(tokens, hidden, cell, packed):
    L, B, H = hidden.shape
    V = packed["embedding"].shape[0]
    V_pad = packed["fc_b"].shape[1]
    tok2d = tokens.reshape(B, 1).astype(jnp.int32)

    # Pack (h, c) for all layers into one lane-dense (B, 2*L*H) slab: [h_0|c_0|h_1|c_1|...]
    state_in = jnp.transpose(jnp.stack([hidden, cell], axis=1),     # (L, 2, B, H)
                             (2, 0, 1, 3)).reshape(B, 2 * L * H)

    inputs = [tok2d, packed["embedding"], state_in,
              packed["w_ih_all"], packed["w_hh_all"], packed["b_all"],
              packed["fc_w"], packed["fc_b"]]

    vmem = pl.BlockSpec(memory_space=pltpu.MemorySpace.VMEM)
    out_shapes = (
        jax.ShapeDtypeStruct((B, V_pad), jnp.float32),       # lane-padded logits
        jax.ShapeDtypeStruct((B, 2 * L * H), jnp.float32),   # packed (h, c) state
    )
    logits_pad, state_out = pl.pallas_call(
        functools.partial(decoder_kernel, L, H),
        out_shape=out_shapes,
        in_specs=[vmem] * len(inputs),
        out_specs=(vmem, vmem),
        input_output_aliases={2: 1},      # state_in buffer reused for state_out
    )(*inputs)

    logits = logits_pad[:, :V]
    so = jnp.transpose(state_out.reshape(B, L, 2, H), (1, 2, 0, 3))  # (L, 2, B, H)
    return logits, so[:, 0], so[:, 1]


def decoder_reference(tokens, hidden, cell, params):
    # Pure-JAX f32 reference (PyTorch LSTM cell, gate order i, f, g, o).
    x = params["embedding"][tokens]
    L = hidden.shape[0]
    hs, cs = [], []
    for l in range(L):
        w_ih, w_hh, b = params["w_ih"][l], params["w_hh"][l], params["b"][l]
        h_prev, c_prev = hidden[l], cell[l]
        z = [x @ w_ih[g] + h_prev @ w_hh[g] + b[g] for g in range(4)]
        i = jax.nn.sigmoid(z[0])
        f = jax.nn.sigmoid(z[1])
        g = jnp.tanh(z[2])
        o = jax.nn.sigmoid(z[3])
        c_new = f * c_prev + i * g
        h_new = o * jnp.tanh(c_new)
        hs.append(h_new)
        cs.append(c_new)
        x = h_new
    logits = x @ params["fc_w"] + params["fc_b"]
    return logits, jnp.stack(hs), jnp.stack(cs)


def make_params(key, num_embeddings, embedding_dim, hidden_size, num_layers):
    keys = jax.random.split(key, 4 + 4 * num_layers)
    kiter = iter(keys)
    scale = 1.0 / jnp.sqrt(jnp.float32(hidden_size))
    params = {
        "embedding": jax.random.normal(next(kiter),
                                       (num_embeddings, embedding_dim), jnp.float32),
        "w_ih": [],
        "w_hh": [],
        "b": [],
    }
    for l in range(num_layers):
        in_dim = embedding_dim if l == 0 else hidden_size
        params["w_ih"].append(
            jax.random.uniform(next(kiter), (4, in_dim, hidden_size),
                               jnp.float32, -scale, scale))
        params["w_hh"].append(
            jax.random.uniform(next(kiter), (4, hidden_size, hidden_size),
                               jnp.float32, -scale, scale))
        # combined b_ih + b_hh
        params["b"].append(
            jax.random.uniform(next(kiter), (4, 1, hidden_size),
                               jnp.float32, -scale, scale))
    params["fc_w"] = jax.random.uniform(next(kiter), (hidden_size, num_embeddings),
                                        jnp.float32, -scale, scale)
    params["fc_b"] = jax.random.uniform(next(kiter), (1, num_embeddings),
                                        jnp.float32, -scale, scale)
    return params


if __name__ == "__main__":
    NUM_EMBEDDINGS = 32   # vocab
    EMBEDDING_DIM = 16
    HIDDEN_SIZE = 32      # -> 4H = 128 (lane-dense gate slab), 2*L*H = 128 (dense state slab)
    NUM_LAYERS = 2
    BATCH = 8

    key = jax.random.PRNGKey(0)
    k_par, k_tok, k_h, k_c = jax.random.split(key, 4)

    params = make_params(k_par, NUM_EMBEDDINGS, EMBEDDING_DIM, HIDDEN_SIZE, NUM_LAYERS)
    packed = pack_params(params)    # one-time host-side packing

    tokens = jax.random.randint(k_tok, (BATCH,), 0, NUM_EMBEDDINGS, jnp.int32)
    hidden = jax.random.normal(k_h, (NUM_LAYERS, BATCH, HIDDEN_SIZE), jnp.float32)
    cell = jax.random.normal(k_c, (NUM_LAYERS, BATCH, HIDDEN_SIZE), jnp.float32)

    logits, h_out, c_out = decoder_forward(tokens, hidden, cell, packed)
    jax.block_until_ready((logits, h_out, c_out))

    # Correctness check against the pure-JAX f32 reference (kernel matmuls are bf16,
    # f32-accumulated, hence the loosened tolerance).
    logits_r, h_r, c_r = decoder_reference(tokens, hidden, cell, params)
    assert logits.shape == (BATCH, NUM_EMBEDDINGS)
    assert h_out.shape == (NUM_LAYERS, BATCH, HIDDEN_SIZE)
    assert c_out.shape == (NUM_LAYERS, BATCH, HIDDEN_SIZE)
    assert jnp.allclose(logits, logits_r, atol=2e-2, rtol=2e-2)
    assert jnp.allclose(h_out, h_r, atol=2e-2, rtol=2e-2)
    assert jnp.allclose(c_out, c_r, atol=2e-2, rtol=2e-2)

    print("KERNEL_OK")
</pallas_src>

<mosaic_0001>
module attributes {stable_mosaic.version = 11 : i64} {
  func.func @decoder_kernel(%arg0: memref<8x1xi32, #tpu.memory_space<vmem>>, %arg1: memref<32x32xf32, #tpu.memory_space<vmem>>, %arg2: memref<8x128xf32, #tpu.memory_space<vmem>>, %arg3: memref<2x32x128xbf16, #tpu.memory_space<vmem>>, %arg4: memref<2x32x128xbf16, #tpu.memory_space<vmem>>, %arg5: memref<2x1x128xf32, #tpu.memory_space<vmem>>, %arg6: memref<32x128xbf16, #tpu.memory_space<vmem>>, %arg7: memref<1x128xf32, #tpu.memory_space<vmem>>, %arg8: memref<8x128xf32, #tpu.memory_space<vmem>>, %arg9: memref<8x128xf32, #tpu.memory_space<vmem>>) attributes {dimension_semantics = [], scalar_prefetch = 0 : i64, scratch_operands = 0 : i64, tpu.core_type = #tpu.core_type<tc>} {
    %c0 = arith.constant 0 : index
    %c0_0 = arith.constant 0 : index
    %0 = vector.load %arg0[%c0, %c0_0] : memref<8x1xi32, #tpu.memory_space<vmem>>, vector<8x1xi32>
    %1 = tpu.iota {dimensions = array<i32: 1>} : vector<8x32xi32>
    %2 = vector.broadcast %0 : vector<8x1xi32> to vector<8x32xi32>
    %3 = arith.cmpi eq, %1, %2 : vector<8x32xi32>
    %4 = arith.extui %3 : vector<8x32xi1> to vector<8x32xi32>
    %5 = arith.sitofp %4 : vector<8x32xi32> to vector<8x32xf32>
    %c0_1 = arith.constant 0 : index
    %c0_2 = arith.constant 0 : index
    %6 = vector.load %arg1[%c0_1, %c0_2] : memref<32x32xf32, #tpu.memory_space<vmem>>, vector<32x32xf32>
    %cst = arith.constant dense<0.000000e+00> : vector<8x32xf32>
    %7 = tpu.matmul %5, %6, %cst {dimension_numbers = #tpu.dot_dimension_numbers<[1], [0], [0], [1], [0, 0, 1, 1], [], []>} : vector<8x32xf32>, vector<32x32xf32>, vector<8x32xf32> -> vector<8x32xf32>
    %8 = tpu.iota {dimensions = array<i32: 1>} : vector<8x128xi32>
    %c96_i32 = arith.constant 96 : i32
    %9 = vector.broadcast %c96_i32 : i32 to vector<8x128xi32>
    %10 = arith.cmpi slt, %8, %9 : vector<8x128xi32>
    %c0_3 = arith.constant 0 : index
    %c0_4 = arith.constant 0 : index
    %11 = vector.load %arg2[%c0_3, %c0_4] : memref<8x128xf32, #tpu.memory_space<vmem>>, vector<8x32xf32>
    %c0_5 = arith.constant 0 : index
    %c32 = arith.constant 32 : index
    %12 = vector.load %arg2[%c0_5, %c32] : memref<8x128xf32, #tpu.memory_space<vmem>>, vector<8x32xf32>
    %13 = arith.truncf %7 : vector<8x32xf32> to vector<8x32xbf16>
    %c0_6 = arith.constant 0 : index
    %c0_7 = arith.constant 0 : index
    %c0_8 = arith.constant 0 : index
    %14 = vector.load %arg3[%c0_6, %c0_7, %c0_8] : memref<2x32x128xbf16, #tpu.memory_space<vmem>>, vector<1x32x128xbf16>
    %15 = vector.shape_cast %14 : vector<1x32x128xbf16> to vector<32x128xbf16>
    %cst_9 = arith.constant dense<0.000000e+00> : vector<8x128xf32>
    %16 = tpu.matmul %13, %15, %cst_9 {dimension_numbers = #tpu.dot_dimension_numbers<[1], [0], [0], [1], [0, 0, 1, 1], [], []>} : vector<8x32xbf16>, vector<32x128xbf16>, vector<8x128xf32> -> vector<8x128xf32>
    %17 = arith.truncf %11 : vector<8x32xf32> to vector<8x32xbf16>
    %c0_10 = arith.constant 0 : index
    %c0_11 = arith.constant 0 : index
    %c0_12 = arith.constant 0 : index
    %18 = vector.load %arg4[%c0_10, %c0_11, %c0_12] : memref<2x32x128xbf16, #tpu.memory_space<vmem>>, vector<1x32x128xbf16>
    %19 = vector.shape_cast %18 : vector<1x32x128xbf16> to vector<32x128xbf16>
    %cst_13 = arith.constant dense<0.000000e+00> : vector<8x128xf32>
    %20 = tpu.matmul %17, %19, %cst_13 {dimension_numbers = #tpu.dot_dimension_numbers<[1], [0], [0], [1], [0, 0, 1, 1], [], []>} : vector<8x32xbf16>, vector<32x128xbf16>, vector<8x128xf32> -> vector<8x128xf32>
    %21 = arith.addf %16, %20 : vector<8x128xf32>
    %c0_14 = arith.constant 0 : index
    %c0_15 = arith.constant 0 : index
    %c0_16 = arith.constant 0 : index
    %22 = vector.load %arg5[%c0_14, %c0_15, %c0_16] : memref<2x1x128xf32, #tpu.memory_space<vmem>>, vector<1x1x128xf32>
    %23 = vector.shape_cast %22 : vector<1x1x128xf32> to vector<1x128xf32>
    %24 = vector.broadcast %23 : vector<1x128xf32> to vector<8x128xf32>
    %25 = arith.addf %21, %24 : vector<8x128xf32>
    %cst_17 = arith.constant 5.000000e-01 : f32
    %26 = vector.broadcast %cst_17 : f32 to vector<8x128xf32>
    %27 = arith.mulf %26, %25 : vector<8x128xf32>
    %28 = arith.select %10, %27, %25 : vector<8x128xi1>, vector<8x128xf32>
    %29 = math.tanh %28 : vector<8x128xf32>
    %cst_18 = arith.constant 1.000000e+00 : f32
    %30 = vector.broadcast %cst_18 : f32 to vector<8x128xf32>
    %31 = arith.addf %29, %30 : vector<8x128xf32>
    %cst_19 = arith.constant 5.000000e-01 : f32
    %32 = vector.broadcast %cst_19 : f32 to vector<8x128xf32>
    %33 = arith.mulf %32, %31 : vector<8x128xf32>
    %34 = arith.select %10, %33, %29 : vector<8x128xi1>, vector<8x128xf32>
    %35 = vector.extract_strided_slice %34 {offsets = [0, 0], sizes = [8, 32], strides = [1, 1]} : vector<8x128xf32> to vector<8x32xf32>
    %36 = vector.extract_strided_slice %34 {offsets = [0, 32], sizes = [8, 32], strides = [1, 1]} : vector<8x128xf32> to vector<8x32xf32>
    %37 = vector.extract_strided_slice %34 {offsets = [0, 64], sizes = [8, 32], strides = [1, 1]} : vector<8x128xf32> to vector<8x32xf32>
    %38 = vector.extract_strided_slice %34 {offsets = [0, 96], sizes = [8, 32], strides = [1, 1]} : vector<8x128xf32> to vector<8x32xf32>
    %39 = arith.mulf %36, %12 : vector<8x32xf32>
    %40 = arith.mulf %35, %38 : vector<8x32xf32>
    %41 = arith.addf %39, %40 : vector<8x32xf32>
    %42 = math.tanh %41 : vector<8x32xf32>
    %43 = arith.mulf %37, %42 : vector<8x32xf32>
    %c0_20 = arith.constant 0 : index
    %c0_21 = arith.constant 0 : index
    %44 = vector.load %arg9[%c0_20, %c0_21] : memref<8x128xf32, #tpu.memory_space<vmem>>, vector<8x32xf32>
    tpu.vector_store %arg9[%c0_20, %c0_21], %43 {strides = array<i32>} : memref<8x128xf32, #tpu.memory_space<vmem>>, vector<8x32xf32>,
    %c0_22 = arith.constant 0 : index
    %c32_23 = arith.constant 32 : index
    %45 = vector.load %arg9[%c0_22, %c32_23] : memref<8x128xf32, #tpu.memory_space<vmem>>, vector<8x32xf32>
    tpu.vector_store %arg9[%c0_22, %c32_23], %41 {strides = array<i32>} : memref<8x128xf32, #tpu.memory_space<vmem>>, vector<8x32xf32>,
    %c0_24 = arith.constant 0 : index
    %c64 = arith.constant 64 : index
    %46 = vector.load %arg2[%c0_24, %c64] : memref<8x128xf32, #tpu.memory_space<vmem>>, vector<8x32xf32>
    %c0_25 = arith.constant 0 : index
    %c96 = arith.constant 96 : index
    %47 = vector.load %arg2[%c0_25, %c96] : memref<8x128xf32, #tpu.memory_space<vmem>>, vector<8x32xf32>
    %48 = arith.truncf %43 : vector<8x32xf32> to vector<8x32xbf16>
    %c1 = arith.constant 1 : index
    %c0_26 = arith.constant 0 : index
    %c0_27 = arith.constant 0 : index
    %49 = vector.load %arg3[%c1, %c0_26, %c0_27] : memref<2x32x128xbf16, #tpu.memory_space<vmem>>, vector<1x32x128xbf16>
    %50 = vector.shape_cast %49 : vector<1x32x128xbf16> to vector<32x128xbf16>
    %cst_28 = arith.constant dense<0.000000e+00> : vector<8x128xf32>
    %51 = tpu.matmul %48, %50, %cst_28 {dimension_numbers = #tpu.dot_dimension_numbers<[1], [0], [0], [1], [0, 0, 1, 1], [], []>} : vector<8x32xbf16>, vector<32x128xbf16>, vector<8x128xf32> -> vector<8x128xf32>
    %52 = arith.truncf %46 : vector<8x32xf32> to vector<8x32xbf16>
    %c1_29 = arith.constant 1 : index
    %c0_30 = arith.constant 0 : index
    %c0_31 = arith.constant 0 : index
    %53 = vector.load %arg4[%c1_29, %c0_30, %c0_31] : memref<2x32x128xbf16, #tpu.memory_space<vmem>>, vector<1x32x128xbf16>
    %54 = vector.shape_cast %53 : vector<1x32x128xbf16> to vector<32x128xbf16>
    %cst_32 = arith.constant dense<0.000000e+00> : vector<8x128xf32>
    %55 = tpu.matmul %52, %54, %cst_32 {dimension_numbers = #tpu.dot_dimension_numbers<[1], [0], [0], [1], [0, 0, 1, 1], [], []>} : vector<8x32xbf16>, vector<32x128xbf16>, vector<8x128xf32> -> vector<8x128xf32>
    %56 = arith.addf %51, %55 : vector<8x128xf32>
    %c1_33 = arith.constant 1 : index
    %c0_34 = arith.constant 0 : index
    %c0_35 = arith.constant 0 : index
    %57 = vector.load %arg5[%c1_33, %c0_34, %c0_35] : memref<2x1x128xf32, #tpu.memory_space<vmem>>, vector<1x1x128xf32>
    %58 = vector.shape_cast %57 : vector<1x1x128xf32> to vector<1x128xf32>
    %59 = vector.broadcast %58 : vector<1x128xf32> to vector<8x128xf32>
    %60 = arith.addf %56, %59 : vector<8x128xf32>
    %cst_36 = arith.constant 5.000000e-01 : f32
    %61 = vector.broadcast %cst_36 : f32 to vector<8x128xf32>
    %62 = arith.mulf %61, %60 : vector<8x128xf32>
    %63 = arith.select %10, %62, %60 : vector<8x128xi1>, vector<8x128xf32>
    %64 = math.tanh %63 : vector<8x128xf32>
    %cst_37 = arith.constant 1.000000e+00 : f32
    %65 = vector.broadcast %cst_37 : f32 to vector<8x128xf32>
    %66 = arith.addf %64, %65 : vector<8x128xf32>
    %cst_38 = arith.constant 5.000000e-01 : f32
    %67 = vector.broadcast %cst_38 : f32 to vector<8x128xf32>
    %68 = arith.mulf %67, %66 : vector<8x128xf32>
    %69 = arith.select %10, %68, %64 : vector<8x128xi1>, vector<8x128xf32>
    %70 = vector.extract_strided_slice %69 {offsets = [0, 0], sizes = [8, 32], strides = [1, 1]} : vector<8x128xf32> to vector<8x32xf32>
    %71 = vector.extract_strided_slice %69 {offsets = [0, 32], sizes = [8, 32], strides = [1, 1]} : vector<8x128xf32> to vector<8x32xf32>
    %72 = vector.extract_strided_slice %69 {offsets = [0, 64], sizes = [8, 32], strides = [1, 1]} : vector<8x128xf32> to vector<8x32xf32>
    %73 = vector.extract_strided_slice %69 {offsets = [0, 96], sizes = [8, 32], strides = [1, 1]} : vector<8x128xf32> to vector<8x32xf32>
    %74 = arith.mulf %71, %47 : vector<8x32xf32>
    %75 = arith.mulf %70, %73 : vector<8x32xf32>
    %76 = arith.addf %74, %75 : vector<8x32xf32>
    %77 = math.tanh %76 : vector<8x32xf32>
    %78 = arith.mulf %72, %77 : vector<8x32xf32>
    %c0_39 = arith.constant 0 : index
    %c64_40 = arith.constant 64 : index
    %79 = vector.load %arg9[%c0_39, %c64_40] : memref<8x128xf32, #tpu.memory_space<vmem>>, vector<8x32xf32>
    tpu.vector_store %arg9[%c0_39, %c64_40], %78 {strides = array<i32>} : memref<8x128xf32, #tpu.memory_space<vmem>>, vector<8x32xf32>,
    %c0_41 = arith.constant 0 : index
    %c96_42 = arith.constant 96 : index
    %80 = vector.load %arg9[%c0_41, %c96_42] : memref<8x128xf32, #tpu.memory_space<vmem>>, vector<8x32xf32>
    tpu.vector_store %arg9[%c0_41, %c96_42], %76 {strides = array<i32>} : memref<8x128xf32, #tpu.memory_space<vmem>>, vector<8x32xf32>,
    %81 = arith.truncf %78 : vector<8x32xf32> to vector<8x32xbf16>
    %c0_43 = arith.constant 0 : index
    %c0_44 = arith.constant 0 : index
    %82 = vector.load %arg6[%c0_43, %c0_44] : memref<32x128xbf16, #tpu.memory_space<vmem>>, vector<32x128xbf16>
    %cst_45 = arith.constant dense<0.000000e+00> : vector<8x128xf32>
    %83 = tpu.matmul %81, %82, %cst_45 {dimension_numbers = #tpu.dot_dimension_numbers<[1], [0], [0], [1], [0, 0, 1, 1], [], []>} : vector<8x32xbf16>, vector<32x128xbf16>, vector<8x128xf32> -> vector<8x128xf32>
    %c0_46 = arith.constant 0 : index
    %c0_47 = arith.constant 0 : index
    %84 = vector.load %arg7[%c0_46, %c0_47] : memref<1x128xf32, #tpu.memory_space<vmem>>, vector<1x128xf32>
    %85 = vector.broadcast %84 : vector<1x128xf32> to vector<8x128xf32>
    %86 = arith.addf %83, %85 : vector<8x128xf32>
    %c0_48 = arith.constant 0 : index
    %c0_49 = arith.constant 0 : index
    %87 = vector.load %arg8[%c0_48, %c0_49] : memref<8x128xf32, #tpu.memory_space<vmem>>, vector<8x128xf32>
    tpu.vector_store %arg8[%c0_48, %c0_49], %86 {strides = array<i32>} : memref<8x128xf32, #tpu.memory_space<vmem>>, vector<8x128xf32>,
    return
  }
}

</mosaic_0001>

<llo_original>
// kernel: decoder_forward.1
$region0: #{decoder_forward.1}
  #allocation0 [shape = 'u32[]', space=smem, size = 0x4, offset = 0x4, fixed_abs, tag = 'smem constant byte address 0x4 - core index']
  #allocation1 [shape = 'u32[144,128]{1,0:T(1,128)}', space=vmem, size = 0x12000, scoped, tag = 'internal scratch']
  %s0 = inlined_call_operand.vmem [shape: s32[8,1], index: 0, kind: input, shape index: {}]
  %s1 = inlined_call_operand.vmem [shape: f32[32,32], index: 1, kind: input, shape index: {}]
  %s2 = inlined_call_operand.vmem [shape: f32[8,128], index: 2, kind: input, shape index: {}, may-alias: {2,9}]
  %s3 = inlined_call_operand.vmem [shape: bf16[2,32,128], index: 3, kind: input, shape index: {}]
  %s4 = inlined_call_operand.vmem [shape: bf16[2,32,128], index: 4, kind: input, shape index: {}]
  %s5 = inlined_call_operand.vmem [shape: f32[2,1,128], index: 5, kind: input, shape index: {}]
  %s6 = inlined_call_operand.vmem [shape: bf16[32,128], index: 6, kind: input, shape index: {}]
  %s7 = inlined_call_operand.vmem [shape: f32[1,128], index: 7, kind: input, shape index: {}]
  %s8 = inlined_call_operand.hbm [shape: f32[8,128], index: 8, kind: output, shape index: {0}]
  %s9 = inlined_call_operand.vmem [shape: f32[8,128], index: 9, kind: output, shape index: {1}, may-alias: {2,9}]
  %10 = xla_tuple %s8, %s9
  %s11 = sld [smem:[#allocation0]]
  $region50: #{decoder_forward.1} parent=0
    _
  %s13 = ssub.s32 1, %s11
  %s14 = scalar_select 0, %s13, %s11
  $region1: #{decoder_forward.1} parent=0
    #allocation2 [shape = 'u8[4096]{0}', space=vmem, size = 0x1000, scoped, tag = 'output window, operand 0, single buffered']
    #allocation3 [shape = 's32[1]{0}', space=sflag, size = 0x4, scoped, tag = 'scoped memory for decoder_forward.1']
    %15 = vsyncpa [#allocation3], 0
    // Predicated region
    $region2: #{decoder_forward.1} parent=1 // pred_check
      _
    $region3: #{decoder_forward.1} parent=1 // pred_check_branch
      %17 = sbr.rel (0) target = $region5
    $region4: #{decoder_forward.1} parent=1 // pred_region
      _
    $region5: #{decoder_forward.1} parent=1 // pred_fallthru
      _
    // Predicated region
    $region6: #{decoder_forward.1} parent=1 // pred_check
      _
    $region7: #{decoder_forward.1} parent=1 // pred_check_branch
      %19 = sbr.rel (0) target = $region9
    $region8: #{decoder_forward.1} parent=1 // pred_region
      _
    $region9: #{decoder_forward.1} parent=1 // pred_fallthru
      _
    // Predicated region
    $region10: #{decoder_forward.1} parent=1 // pred_check
      _
    $region11: #{decoder_forward.1} parent=1 // pred_check_branch
      %21 = sbr.rel (0) target = $region13
    $region12: #{decoder_forward.1} parent=1 // pred_region
      _
    $region13: #{decoder_forward.1} parent=1 // pred_fallthru
      _
    // Predicated region
    $region14: #{decoder_forward.1} parent=1 // pred_check
      _
    $region15: #{decoder_forward.1} parent=1 // pred_check_branch
      %23 = sbr.rel (0) target = $region17
    $region16: #{decoder_forward.1} parent=1 // pred_region
      _
    $region17: #{decoder_forward.1} parent=1 // pred_fallthru
      _
    // Predicated region
    $region18: #{decoder_forward.1} parent=1 // pred_check
      _
    $region19: #{decoder_forward.1} parent=1 // pred_check_branch
      %25 = sbr.rel (0) target = $region21
    $region20: #{decoder_forward.1} parent=1 // pred_region
      _
    $region21: #{decoder_forward.1} parent=1 // pred_fallthru
      _
    // Predicated region
    $region22: #{decoder_forward.1} parent=1 // pred_check
      _
    $region23: #{decoder_forward.1} parent=1 // pred_check_branch
      %27 = sbr.rel (0) target = $region25
    $region24: #{decoder_forward.1} parent=1 // pred_region
      _
    $region25: #{decoder_forward.1} parent=1 // pred_fallthru
      _
    // Predicated region
    $region26: #{decoder_forward.1} parent=1 // pred_check
      _
    $region27: #{decoder_forward.1} parent=1 // pred_check_branch
      %29 = sbr.rel (0) target = $region29
    $region28: #{decoder_forward.1} parent=1 // pred_region
      _
    $region29: #{decoder_forward.1} parent=1 // pred_fallthru
      _
    // Predicated region
    $region30: #{decoder_forward.1} parent=1 // pred_check
      _
    $region31: #{decoder_forward.1} parent=1 // pred_check_branch
      %31 = sbr.rel (0) target = $region33
    $region32: #{decoder_forward.1} parent=1 // pred_region
      _
    $region33: #{decoder_forward.1} parent=1 // pred_fallthru
      _
    %v33 = vld [vmem:[%s0] sm:$0xff]
    %v34 = vlaneseq
    %v35 = vand.u32 %v34, 127
    %36 = vset.pattern.permute.xlu0 0
    %37 = vperm.xlu0 %36, %v33
    %v38 = vpop.permute.xlu0 %37
    %vm39 = vcmp.eq.s32.totalorder %v35, %v38
    %v40 = vsel %vm39, 1, 0
    %v41 = vcvt.s32.f32 %v40
    %v42 = vld [vmem:[%s1] sm:$0xff]
    %v43 = vld [vmem:[%s1 + $0x8] sm:$0xff]
    %v44 = vld [vmem:[%s1 + $0x10] sm:$0xff]
    %v45 = vld [vmem:[%s1 + $0x18] sm:$0xff]
    %vm46 = vcmask 261120
    %v48 = vsel %vm46, %v41, 0
    %50 = vmatprep.subr.mxu0 0.0
    %51 = vmatpush1.msra.mxu0 0.0
    %52 = vmatprep.subr.mxu0 0.0
    %53 = vmatpush1.msra.mxu0 0.0
    %54 = vmatprep.subr.mxu0 0.0
    %55 = vmatpush1.msra.mxu0 0.0
    %56 = vmatprep.subr.mxu0 0.0
    %57 = vmatpush1.msra.mxu0 0.0
    %58 = vmatprep.subr.mxu0 0.0
    %59 = vmatpush1.msra.mxu0 0.0
    %60 = vmatprep.subr.mxu0 0.0
    %61 = vmatpush1.msra.mxu0 0.0
    %62 = vmatprep.subr.mxu0 0.0
    %63 = vmatpush1.msra.mxu0 0.0
    %64 = vmatprep.subr.mxu0 0.0
    %65 = vmatpush1.msra.mxu0 0.0
    %66 = vmatprep.subr.mxu0 0.0
    %67 = vmatpush1.msra.mxu0 0.0
    %68 = vmatprep.subr.mxu0 0.0
    %69 = vmatpush1.msra.mxu0 0.0
    %70 = vmatprep.subr.mxu0 0.0
    %71 = vmatpush1.msra.mxu0 0.0
    %72 = vmatprep.subr.mxu0 0.0
    %73 = vmatpush1.msra.mxu0 0.0
    %74 = vmatprep.subr.mxu0 0.0
    %75 = vmatpush1.msra.mxu0 %v45
    %76 = vmatprep.subr.mxu0 0.0
    %77 = vmatpush1.msra.mxu0 %v44
    %78 = vmatprep.subr.mxu0 0.0
    %79 = vmatpush1.msra.mxu0 %v43
    %80 = vmatprep.subr.mxu0 0.0
    %81 = vmatpush1.msra.mxu0 %v42
    %82 = vmatprep.subr.mxu0 0.0
    %83 = vmatpush2.msra.mxu0 0.0
    %84 = vmatprep.subr.mxu0 0.0
    %85 = vmatpush2.msra.mxu0 0.0
    %86 = vmatprep.subr.mxu0 0.0
    %87 = vmatpush2.msra.mxu0 0.0
    %88 = vmatprep.subr.mxu0 0.0
    %89 = vmatpush2.msra.mxu0 0.0
    %90 = vmatprep.subr.mxu0 0.0
    %91 = vmatpush2.msra.mxu0 0.0
    %92 = vmatprep.subr.mxu0 0.0
    %93 = vmatpush2.msra.mxu0 0.0
    %94 = vmatprep.subr.mxu0 0.0
    %95 = vmatpush2.msra.mxu0 0.0
    %96 = vmatprep.subr.mxu0 0.0
    %97 = vmatpush2.msra.mxu0 0.0
    %98 = vmatprep.subr.mxu0 0.0
    %99 = vmatpush2.msra.mxu0 0.0
    %100 = vmatprep.subr.mxu0 0.0
    %101 = vmatpush2.msra.mxu0 0.0
    %102 = vmatprep.subr.mxu0 0.0
    %103 = vmatpush2.msra.mxu0 0.0
    %104 = vmatprep.subr.mxu0 0.0
    %105 = vmatpush2.msra.mxu0 0.0
    %106 = vmatprep.subr.mxu0 0.0
    %107 = vmatpush2.msra.mxu0 0.0
    %108 = vmatprep.subr.mxu0 0.0
    %109 = vmatpush2.msra.mxu0 0.0
    %110 = vmatprep.subr.mxu0 0.0
    %111 = vmatpush2.msra.mxu0 0.0
    %112 = vmatprep.subr.mxu0 0.0
    %113 = vmatpush2.msra.mxu0 0.0
    %114 = vmatprep.mubr.f32.mxu0 0.0
    %115 = vmatmul.mubr.f32.gmra.mxu0 %v48
    %v116 = vpop.f32.mrf.mxu0
    %v117 = vadd.f32 0.0, %v116
    %v118 = vpop.f32.mrf.mxu0
    %119 = vdwg.mxu0
    %vm120 = vcmp.lt.s32.totalorder %v35, 96
    %v121 = vld [vmem:[%s2] sm:$0xff]
    %v122 = vpack.c.bf16 %v117, %v117
    %v123 = vld [vmem:[%s3] sm:$0xf]
    %v124 = vld [vmem:[%s3 + $0x4] sm:$0xf]
    %v125 = vld [vmem:[%s3 + $0x8] sm:$0xf]
    %v126 = vld [vmem:[%s3 + $0xc] sm:$0xf]
    %v127 = vpack.c.bf16 %v121, %v121
    %v128 = vld [vmem:[%s4] sm:$0xf]
    %v129 = vld [vmem:[%s4 + $0x4] sm:$0xf]
    %v130 = vld [vmem:[%s4 + $0x8] sm:$0xf]
    %v131 = vld [vmem:[%s4 + $0xc] sm:$0xf]
    %v136 = vunpack.c.l.b16 %v128
    %v137 = vunpack.c.l.b16 %v129
    %v138 = vunpack.c.l.b16 %v130
    %v139 = vunpack.c.l.b16 %v131
    %v140 = vpack.c.b16 %v137, %v136
    %v141 = vpack.c.b16 %v139, %v138
    %v145 = vsel %vm46, %v127, 0
    %147 = vmatprep.subr.bf16.mxu0 0
    %148 = vmatpush1.bf16.msra.mxu0 0
    %149 = vmatprep.subr.bf16.mxu0 0
    %150 = vmatpush1.bf16.msra.mxu0 0
    %151 = vmatprep.subr.bf16.mxu0 0
    %152 = vmatpush1.bf16.msra.mxu0 0
    %153 = vmatprep.subr.bf16.mxu0 0
    %154 = vmatpush1.bf16.msra.mxu0 0
    %155 = vmatprep.subr.bf16.mxu0 0
    %156 = vmatpush1.bf16.msra.mxu0 0
    %157 = vmatprep.subr.bf16.mxu0 0
    %158 = vmatpush1.bf16.msra.mxu0 0
    %159 = vmatprep.subr.bf16.mxu0 0
    %160 = vmatpush1.bf16.msra.mxu0 %v141
    %161 = vmatprep.subr.bf16.mxu0 0
    %162 = vmatpush1.bf16.msra.mxu0 %v140
    %163 = vmatprep.subr.bf16.mxu0 0
    %164 = vmatpush2.bf16.msra.mxu0 0
    %165 = vmatprep.subr.bf16.mxu0 0
    %166 = vmatpush2.bf16.msra.mxu0 0
    %167 = vmatprep.subr.bf16.mxu0 0
    %168 = vmatpush2.bf16.msra.mxu0 0
    %169 = vmatprep.subr.bf16.mxu0 0
    %170 = vmatpush2.bf16.msra.mxu0 0
    %171 = vmatprep.subr.bf16.mxu0 0
    %172 = vmatpush2.bf16.msra.mxu0 0
    %173 = vmatprep.subr.bf16.mxu0 0
    %174 = vmatpush2.bf16.msra.mxu0 0
    %175 = vmatprep.subr.bf16.mxu0 0
    %176 = vmatpush2.bf16.msra.mxu0 0
    %177 = vmatprep.subr.bf16.mxu0 0
    %178 = vmatpush2.bf16.msra.mxu0 0
    %179 = vmatprep.mubr.bf16.mxu0 0
    %180 = vmatmul.mubr.bf16.gmra.mxu0 %v145
    %v181 = vpop.f32.mrf.mxu0
    %v182 = vadd.f32 0.0, %v181
    %v183 = vpop.f32.mrf.mxu0
    %v184 = vpop.f32.mrf.mxu0
    %v185 = vpop.f32.mrf.mxu0
    %186 = vdwg.mxu0
    %v191 = vunpack.c.l.b16 %v123
    %v192 = vunpack.c.l.b16 %v124
    %v193 = vunpack.c.l.b16 %v125
    %v194 = vunpack.c.l.b16 %v126
    %v195 = vpack.c.b16 %v192, %v191
    %v196 = vpack.c.b16 %v194, %v193
    %v200 = vsel %vm46, %v122, 0
    %202 = vmatprep.subr.bf16.mxu0 0
    %203 = vmatpush1.bf16.msra.mxu0 0
    %204 = vmatprep.subr.bf16.mxu0 0
    %205 = vmatpush1.bf16.msra.mxu0 0
    %206 = vmatprep.subr.bf16.mxu0 0
    %207 = vmatpush1.bf16.msra.mxu0 0
    %208 = vmatprep.subr.bf16.mxu0 0
    %209 = vmatpush1.bf16.msra.mxu0 0
    %210 = vmatprep.subr.bf16.mxu0 0
    %211 = vmatpush1.bf16.msra.mxu0 0
    %212 = vmatprep.subr.bf16.mxu0 0
    %213 = vmatpush1.bf16.msra.mxu0 0
    %214 = vmatprep.subr.bf16.mxu0 0
    %215 = vmatpush1.bf16.msra.mxu0 %v196
    %216 = vmatprep.subr.bf16.mxu0 0
    %217 = vmatpush1.bf16.msra.mxu0 %v195
    %218 = vmatprep.subr.bf16.mxu0 0
    %219 = vmatpush2.bf16.msra.mxu0 0
    %220 = vmatprep.subr.bf16.mxu0 0
    %221 = vmatpush2.bf16.msra.mxu0 0
    %222 = vmatprep.subr.bf16.mxu0 0
    %223 = vmatpush2.bf16.msra.mxu0 0
    %224 = vmatprep.subr.bf16.mxu0 0
    %225 = vmatpush2.bf16.msra.mxu0 0
    %226 = vmatprep.subr.bf16.mxu0 0
    %227 = vmatpush2.bf16.msra.mxu0 0
    %228 = vmatprep.subr.bf16.mxu0 0
    %229 = vmatpush2.bf16.msra.mxu0 0
    %230 = vmatprep.subr.bf16.mxu0 0
    %231 = vmatpush2.bf16.msra.mxu0 0
    %232 = vmatprep.subr.bf16.mxu0 0
    %233 = vmatpush2.bf16.msra.mxu0 0
    %234 = vmatprep.mubr.bf16.mxu0 0
    %235 = vmatmul.mubr.bf16.gmra.mxu0 %v200
    %v236 = vpop.f32.mrf.mxu0
    %v237 = vadd.f32 %v182, %v236
    %v238 = vpop.f32.mrf.mxu0
    %v239 = vpop.f32.mrf.mxu0
    %v240 = vpop.f32.mrf.mxu0
    %241 = vdwg.mxu0
    %v242 = vld [vmem:[%s5] sm:$0x1]
    %v244 = vlaneseq
    %v245 = vshrl.u32 %v244, 7
    %v246 = vsub.s32 0, %v245
    %v247 = vrot.slane %v242, %v246
    %v249 = vadd.f32 %v237, %v247
    %v250 = vmul.f32 %v249, 0.5
    %v251 = vsel %vm120, %v250, %v249
    %v252 = vtanh.pop %v251
    %v253 = vadd.f32 %v252, 1.0
    %v254 = vmul.f32 %v253, 0.5
    %v255 = vsel %vm120, %v254, %v252
    %v256 = vmul.f32 %v255, %v121
    %258 = vrot.lane.b32.xlu0 %v255, 32
    %v259 = vpop.permute.xlu0 %258
    %v261 = vmul.f32 %v255, %v259
    %263 = vrot.lane.b32.xlu0 %v261, 32
    %v264 = vpop.permute.xlu0 %263
    %v266 = vadd.f32 %v256, %v264
    %v267 = vtanh.pop %v266
    %269 = vrot.lane.b32.xlu0 %v267, 32
    %v270 = vpop.permute.xlu0 %269
    %v272 = vmul.f32 %v255, %v270
    %274 = vrot.lane.b32.xlu0 %v272, 64
    %v275 = vpop.permute.xlu0 %274
    %277 = vst.msk [vmem:[%s9] sm:$0xff] %vm46, %v275
    %vm278 = vcmask 523520
    %279 = vst.msk [vmem:[%s9] sm:$0xff] %vm278, %v266
    %v280 = vld [vmem:[%s2] sm:$0xff]
    %v281 = vpack.c.bf16 %v272, %v272
    %s282 = scalar_lea.vmem %s3, 16
    %v283 = vld [vmem:[%s282] sm:$0xf]
    %v284 = vld [vmem:[%s282 + $0x4] sm:$0xf]
    %v285 = vld [vmem:[%s282 + $0x8] sm:$0xf]
    %v286 = vld [vmem:[%s282 + $0xc] sm:$0xf]
    %v287 = vpack.c.bf16 %v280, %v280
    %s288 = scalar_lea.vmem %s4, 16
    %v289 = vld [vmem:[%s288] sm:$0xf]
    %v290 = vld [vmem:[%s288 + $0x4] sm:$0xf]
    %v291 = vld [vmem:[%s288 + $0x8] sm:$0xf]
    %v292 = vld [vmem:[%s288 + $0xc] sm:$0xf]
    %294 = vrot.lane.b32.xlu0 %v287, 64
    %v295 = vpop.permute.xlu0 %294
    %v300 = vunpack.c.l.b16 %v289
    %v301 = vunpack.c.l.b16 %v290
    %v302 = vunpack.c.l.b16 %v291
    %v303 = vunpack.c.l.b16 %v292
    %v304 = vpack.c.b16 %v301, %v300
    %v305 = vpack.c.b16 %v303, %v302
    %v309 = vsel %vm46, %v295, 0
    %311 = vmatprep.subr.bf16.mxu0 0
    %312 = vmatpush1.bf16.msra.mxu0 0
    %313 = vmatprep.subr.bf16.mxu0 0
    %314 = vmatpush1.bf16.msra.mxu0 0
    %315 = vmatprep.subr.bf16.mxu0 0
    %316 = vmatpush1.bf16.msra.mxu0 0
    %317 = vmatprep.subr.bf16.mxu0 0
    %318 = vmatpush1.bf16.msra.mxu0 0
    %319 = vmatprep.subr.bf16.mxu0 0
    %320 = vmatpush1.bf16.msra.mxu0 0
    %321 = vmatprep.subr.bf16.mxu0 0
    %322 = vmatpush1.bf16.msra.mxu0 0
    %323 = vmatprep.subr.bf16.mxu0 0
    %324 = vmatpush1.bf16.msra.mxu0 %v305
    %325 = vmatprep.subr.bf16.mxu0 0
    %326 = vmatpush1.bf16.msra.mxu0 %v304
    %327 = vmatprep.subr.bf16.mxu0 0
    %328 = vmatpush2.bf16.msra.mxu0 0
    %329 = vmatprep.subr.bf16.mxu0 0
    %330 = vmatpush2.bf16.msra.mxu0 0
    %331 = vmatprep.subr.bf16.mxu0 0
    %332 = vmatpush2.bf16.msra.mxu0 0
    %333 = vmatprep.subr.bf16.mxu0 0
    %334 = vmatpush2.bf16.msra.mxu0 0
    %335 = vmatprep.subr.bf16.mxu0 0
    %336 = vmatpush2.bf16.msra.mxu0 0
    %337 = vmatprep.subr.bf16.mxu0 0
    %338 = vmatpush2.bf16.msra.mxu0 0
    %339 = vmatprep.subr.bf16.mxu0 0
    %340 = vmatpush2.bf16.msra.mxu0 0
    %341 = vmatprep.subr.bf16.mxu0 0
    %342 = vmatpush2.bf16.msra.mxu0 0
    %343 = vmatprep.mubr.bf16.mxu0 0
    %344 = vmatmul.mubr.bf16.gmra.mxu0 %v309
    %v345 = vpop.f32.mrf.mxu0
    %v346 = vadd.f32 0.0, %v345
    %v347 = vpop.f32.mrf.mxu0
    %v348 = vpop.f32.mrf.mxu0
    %v349 = vpop.f32.mrf.mxu0
    %350 = vdwg.mxu0
    %352 = vrot.lane.b32.xlu0 %v281, 64
    %v353 = vpop.permute.xlu0 %352
    %v358 = vunpack.c.l.b16 %v283
    %v359 = vunpack.c.l.b16 %v284
    %v360 = vunpack.c.l.b16 %v285
    %v361 = vunpack.c.l.b16 %v286
    %v362 = vpack.c.b16 %v359, %v358
    %v363 = vpack.c.b16 %v361, %v360
    %v367 = vsel %vm46, %v353, 0
    %369 = vmatprep.subr.bf16.mxu0 0
    %370 = vmatpush1.bf16.msra.mxu0 0
    %371 = vmatprep.subr.bf16.mxu0 0
    %372 = vmatpush1.bf16.msra.mxu0 0
    %373 = vmatprep.subr.bf16.mxu0 0
    %374 = vmatpush1.bf16.msra.mxu0 0
    %375 = vmatprep.subr.bf16.mxu0 0
    %376 = vmatpush1.bf16.msra.mxu0 0
    %377 = vmatprep.subr.bf16.mxu0 0
    %378 = vmatpush1.bf16.msra.mxu0 0
    %379 = vmatprep.subr.bf16.mxu0 0
    %380 = vmatpush1.bf16.msra.mxu0 0
    %381 = vmatprep.subr.bf16.mxu0 0
    %382 = vmatpush1.bf16.msra.mxu0 %v363
    %383 = vmatprep.subr.bf16.mxu0 0
    %384 = vmatpush1.bf16.msra.mxu0 %v362
    %385 = vmatprep.subr.bf16.mxu0 0
    %386 = vmatpush2.bf16.msra.mxu0 0
    %387 = vmatprep.subr.bf16.mxu0 0
    %388 = vmatpush2.bf16.msra.mxu0 0
    %389 = vmatprep.subr.bf16.mxu0 0
    %390 = vmatpush2.bf16.msra.mxu0 0
    %391 = vmatprep.subr.bf16.mxu0 0
    %392 = vmatpush2.bf16.msra.mxu0 0
    %393 = vmatprep.subr.bf16.mxu0 0
    %394 = vmatpush2.bf16.msra.mxu0 0
    %395 = vmatprep.subr.bf16.mxu0 0
    %396 = vmatpush2.bf16.msra.mxu0 0
    %397 = vmatprep.subr.bf16.mxu0 0
    %398 = vmatpush2.bf16.msra.mxu0 0
    %399 = vmatprep.subr.bf16.mxu0 0
    %400 = vmatpush2.bf16.msra.mxu0 0
    %401 = vmatprep.mubr.bf16.mxu0 0
    %402 = vmatmul.mubr.bf16.gmra.mxu0 %v367
    %v403 = vpop.f32.mrf.mxu0
    %v404 = vadd.f32 %v346, %v403
    %v405 = vpop.f32.mrf.mxu0
    %v406 = vpop.f32.mrf.mxu0
    %v407 = vpop.f32.mrf.mxu0
    %408 = vdwg.mxu0
    %s409 = scalar_lea.vmem %s5, 1
    %v410 = vld [vmem:[%s409] sm:$0x1]
    %v412 = vlaneseq
    %v413 = vshrl.u32 %v412, 7
    %v414 = vsub.s32 0, %v413
    %v415 = vrot.slane %v410, %v414
    %v417 = vadd.f32 %v404, %v415
    %v418 = vmul.f32 %v417, 0.5
    %v419 = vsel %vm120, %v418, %v417
    %v420 = vtanh.pop %v419
    %v421 = vadd.f32 %v420, 1.0
    %v422 = vmul.f32 %v421, 0.5
    %v423 = vsel %vm120, %v422, %v420
    %425 = vrot.lane.b32.xlu0 %v280, 64
    %v426 = vpop.permute.xlu0 %425
    %v428 = vmul.f32 %v423, %v426
    %430 = vrot.lane.b32.xlu0 %v423, 32
    %v431 = vpop.permute.xlu0 %430
    %v433 = vmul.f32 %v423, %v431
    %435 = vrot.lane.b32.xlu0 %v433, 32
    %v436 = vpop.permute.xlu0 %435
    %v438 = vadd.f32 %v428, %v436
    %v439 = vtanh.pop %v438
    %441 = vrot.lane.b32.xlu0 %v439, 32
    %v442 = vpop.permute.xlu0 %441
    %v444 = vmul.f32 %v423, %v442
    %vm445 = vcmask 785920
    %446 = vst.msk [vmem:[%s9] sm:$0xff] %vm445, %v444
    %448 = vrot.lane.b32.xlu0 %v438, 64
    %v449 = vpop.permute.xlu0 %448
    %vm451 = vcmask 1048320
    %452 = vst.msk [vmem:[%s9] sm:$0xff] %vm451, %v449
    %v453 = vpack.c.bf16 %v444, %v444
    %v454 = vld [vmem:[%s6] sm:$0xf]
    %v455 = vld [vmem:[%s6 + $0x4] sm:$0xf]
    %v456 = vld [vmem:[%s6 + $0x8] sm:$0xf]
    %v457 = vld [vmem:[%s6 + $0xc] sm:$0xf]
    %v458 = vld [vmem:[%s7] sm:$0x1]
    %v460 = vlaneseq
    %v461 = vshrl.u32 %v460, 7
    %v462 = vsub.s32 0, %v461
    %v463 = vrot.slane %v458, %v462
    %466 = vrot.lane.b32.xlu0 %v453, 64
    %v467 = vpop.permute.xlu0 %466
    %v472 = vunpack.c.l.b16 %v454
    %v473 = vunpack.c.l.b16 %v455
    %v474 = vunpack.c.l.b16 %v456
    %v475 = vunpack.c.l.b16 %v457
    %v476 = vpack.c.b16 %v473, %v472
    %v477 = vpack.c.b16 %v475, %v474
    %v481 = vsel %vm46, %v467, 0
    %483 = vmatprep.subr.bf16.mxu0 0
    %484 = vmatpush1.bf16.msra.mxu0 0
    %485 = vmatprep.subr.bf16.mxu0 0
    %486 = vmatpush1.bf16.msra.mxu0 0
    %487 = vmatprep.subr.bf16.mxu0 0
    %488 = vmatpush1.bf16.msra.mxu0 0
    %489 = vmatprep.subr.bf16.mxu0 0
    %490 = vmatpush1.bf16.msra.mxu0 0
    %491 = vmatprep.subr.bf16.mxu0 0
    %492 = vmatpush1.bf16.msra.mxu0 0
    %493 = vmatprep.subr.bf16.mxu0 0
    %494 = vmatpush1.bf16.msra.mxu0 0
    %495 = vmatprep.subr.bf16.mxu0 0
    %496 = vmatpush1.bf16.msra.mxu0 %v477
    %497 = vmatprep.subr.bf16.mxu0 0
    %498 = vmatpush1.bf16.msra.mxu0 %v476
    %499 = vmatprep.subr.bf16.mxu0 0
    %500 = vmatpush2.bf16.msra.mxu0 0
    %501 = vmatprep.subr.bf16.mxu0 0
    %502 = vmatpush2.bf16.msra.mxu0 0
    %503 = vmatprep.subr.bf16.mxu0 0
    %504 = vmatpush2.bf16.msra.mxu0 0
    %505 = vmatprep.subr.bf16.mxu0 0
    %506 = vmatpush2.bf16.msra.mxu0 0
    %507 = vmatprep.subr.bf16.mxu0 0
    %508 = vmatpush2.bf16.msra.mxu0 0
    %509 = vmatprep.subr.bf16.mxu0 0
    %510 = vmatpush2.bf16.msra.mxu0 0
    %511 = vmatprep.subr.bf16.mxu0 0
    %512 = vmatpush2.bf16.msra.mxu0 0
    %513 = vmatprep.subr.bf16.mxu0 0
    %514 = vmatpush2.bf16.msra.mxu0 0
    %515 = vmatprep.mubr.bf16.mxu0 0
    %516 = vmatmul.mubr.bf16.gmra.mxu0 %v481
    %v517 = vpop.f32.mrf.mxu0
    %v518 = vadd.f32 %v463, %v517
    %v519 = vpop.f32.mrf.mxu0
    %v520 = vpop.f32.mrf.mxu0
    %v521 = vpop.f32.mrf.mxu0
    %522 = vdwg.mxu0
    %523 = vst [vmem:[#allocation2] sm:$0xff] %v518
    // Predicated region
    $region34: #{decoder_forward.1} parent=1 // pred_check
      _
    $region35: #{decoder_forward.1} parent=1 // pred_check_branch
      %525 = sbr.rel (0) target = $region37
    $region36: #{decoder_forward.1} parent=1 // pred_region
      %s527 = ssub.s32 128, 128
      %528 = vsyncadd [#allocation3], %s527
      %s530 = sshll.u32 [#allocation2], 4
      %s531 = int_to_ptr.vmem [resolvable:$true] %s530
      %533 = dma.vmem_to_hbm [thread:$0]  %s531, 128, %s8, [#allocation3]
    $region37: #{decoder_forward.1} parent=1 // pred_fallthru
      _
    // Predicated region
    $region38: #{decoder_forward.1} parent=1 // pred_check
      _
    $region39: #{decoder_forward.1} parent=1 // pred_check_branch
      %535 = sbr.rel (0) target = $region41
    $region40: #{decoder_forward.1} parent=1 // pred_region
      _
    $region41: #{decoder_forward.1} parent=1 // pred_fallthru
      _
    // Predicated region
    $region42: #{decoder_forward.1} parent=1 // pred_check
      _
    $region43: #{decoder_forward.1} parent=1 // pred_check_branch
      %537 = sbr.rel (0) target = $region45
    $region44: #{decoder_forward.1} parent=1 // pred_region
      %538 = dma.done [#allocation3], 128
    $region45: #{decoder_forward.1} parent=1 // pred_fallthru
      _
    // Predicated region
    $region46: #{decoder_forward.1} parent=1 // pred_check
      _
    $region47: #{decoder_forward.1} parent=1 // pred_check_branch
      %540 = sbr.rel (0) target = $region49
    $region48: #{decoder_forward.1} parent=1 // pred_region
      _
    $region49: #{decoder_forward.1} parent=1 // pred_fallthru
      _
    %541 = vsyncpa [#allocation3], 1

</llo_original>
